<compile_context>
chip_gen: v7x
topology: tpu7x:2x2x1
jax: 0.10.0
libtpu: 0.0.40
codegen_flags: <defaults>
</compile_context>

<pallas_src>
import functools

import jax
import jax.numpy as jnp
from jax.experimental import pallas as pl
from jax.experimental.pallas import tpu as pltpu


def _crossnet_kernel(x_ref, params_ref, kcol_ref, o_ref, *,
                     layer_num, use_mxu, unrolled):
    """One batch tile of the fused CrossNet stack.

    x_ref      : (block_b, D)       input tile (any float dtype; upcast to f32)
    params_ref : (2*L, D)   f32     rows [0:L) = kernels w_i, rows [L:2L) = biases b_i
    kcol_ref   : (D, 128)   f32     lane-dense weight columns (MXU path) or dummy
    o_ref      : (block_b, D)       output tile (same dtype as x)
    """
    x0 = x_ref[...].astype(jnp.float32)

    if unrolled:
        if use_mxu:
            # Constant across layers: load the weight-column matrix once.
            wcols = kcol_ref[...].astype(jnp.float32)              # (D, 128)
        xl = x0
        for i in range(layer_num):                                 # static -> unrolled
            b = params_ref[layer_num + i:layer_num + i + 1, :]     # (1, D) f32
            if use_mxu:
                # (block_b, D) @ (D, 128) on the otherwise-idle MXU; lane i of
                # the result is <x_l, w_i>.  Other lanes (other layers' weights
                # / zero padding) cost nothing extra on the MXU.
                s = jnp.dot(xl, wcols,
                            preferred_element_type=jnp.float32)[:, i:i + 1]
            else:
                # VPU multiply + XLU row reduction.
                w = params_ref[i:i + 1, :]                         # (1, D) f32
                s = jnp.sum(xl * w, axis=1, keepdims=True)         # (block_b, 1)
            # x_{l+1} = x_0 * s + b_i + x_l   (all VPU, stays in vregs)
            xl = x0 * s + b + xl
    else:
        # Large layer_num: fori_loop bounds live ranges (no per-layer temporaries
        # accumulating in vregs/VMEM).  Weight/bias rows are dynamically sliced.
        def body(i, xl):
            w = params_ref[pl.ds(i, 1), :]                         # (1, D) f32
            b = params_ref[pl.ds(layer_num + i, 1), :]             # (1, D) f32
            s = jnp.sum(xl * w, axis=1, keepdims=True)
            return x0 * s + b + xl
        xl = jax.lax.fori_loop(0, layer_num, body, x0)

    o_ref[...] = xl.astype(o_ref.dtype)


def _pick_block_b(batch, d, in_itemsize, out_itemsize, budget_bytes):
    """VMEM-budget-aware batch tile size (multiple of 8 sublanes).

    Resident bytes per row ~= 2x double-buffered input tile + 2x double-buffered
    output tile + ~4 live f32 working copies (x0, xl, temps) inside the kernel.
    """
    per_row = d * (2 * in_itemsize + 2 * out_itemsize + 4 * 4)
    bb = int(budget_bytes // max(per_row, 1))
    bb = max(8, min(bb, 2048))             # > ~2K rows: diminishing returns
    if batch >= 16:
        # v7x megacore: guarantee >= 2 grid steps so the "parallel" batch axis
        # actually shards across both TensorCores.
        half = ((batch + 1) // 2 + 7) // 8 * 8
        bb = min(bb, half)
    bb = max(8, (bb // 8) * 8)
    if bb >= batch:
        return batch                       # full-extent block is always legal
    return bb


def crossnet_forward(x, kernels, biases, *, block_b=None, use_mxu=None,
                     max_unroll=8, vmem_budget_bytes=16 << 20, donate_x=False):
    """CrossNet forward.  x:(B,D), kernels:(L,D), biases:(L,D) -> (B,D).

    I/O dtype follows x (bf16 supported); all internal compute is float32.
    """
    B, D = x.shape
    L, Dk = kernels.shape
    assert Dk == D and biases.shape == (L, D)

    itemsize = x.dtype.itemsize
    if block_b is None:
        block_b = _pick_block_b(B, D, itemsize, itemsize, vmem_budget_bytes)
    grid = (pl.cdiv(B, block_b),)

    unrolled = L <= max_unroll
    if use_mxu is None:
        use_mxu = L >= 3                   # roofline crossover on v6e/v7x
    use_mxu = bool(use_mxu) and unrolled   # MXU path uses static column slices

    # One packed constant block: rows [0:L) = kernels, rows [L:2L) = biases.
    params = jnp.concatenate(
        [kernels.astype(jnp.float32), biases.astype(jnp.float32)], axis=0)
    if use_mxu:
        # Lane-dense (D, 128) weight-column matrix, zero-padded past L.
        lpad = max(128, ((L + 127) // 128) * 128)
        kcol = jnp.zeros((D, lpad), jnp.float32).at[:, :L].set(
            kernels.astype(jnp.float32).T)
    else:
        kcol = jnp.zeros((8, 128), jnp.float32)    # unused placeholder

    # Scoped-VMEM estimate: double-buffered I/O tiles + constants + f32 working set.
    est = (4 * block_b * D * itemsize
           + 4 * block_b * D * 4
           + params.size * 4 + kcol.size * 4)
    vmem_limit = int(min(48 << 20, max(32 << 20, est + est // 4)))

    kernel = functools.partial(_crossnet_kernel, layer_num=L,
                               use_mxu=use_mxu, unrolled=unrolled)
    return pl.pallas_call(
        kernel,
        out_shape=jax.ShapeDtypeStruct((B, D), x.dtype),
        grid_spec=pltpu.PrefetchScalarGridSpec(
            num_scalar_prefetch=0,
            grid=grid,
            in_specs=[
                pl.BlockSpec((block_b, D), lambda i: (i, 0)),   # batch tile
                pl.BlockSpec(params.shape, lambda i: (0, 0)),   # [kernels; biases]
                pl.BlockSpec(kcol.shape, lambda i: (0, 0)),     # weight columns
            ],
            out_specs=pl.BlockSpec((block_b, D), lambda i: (i, 0)),
        ),
        compiler_params=pltpu.CompilerParams(
            dimension_semantics=("parallel",),   # batch tiles shard across TCs
            vmem_limit_bytes=vmem_limit,
        ),
        input_output_aliases=({0: 0} if donate_x else {}),
    )(x, params, kcol)


def crossnet_reference(x, kernels, biases):
    """Pure-JAX reference mirroring the PyTorch forward (f32 compute)."""
    x0 = x.astype(jnp.float32)
    xl = x0
    for i in range(kernels.shape[0]):
        w = kernels[i][None, :].astype(jnp.float32)
        b = biases[i][None, :].astype(jnp.float32)
        s = jnp.sum(xl * w, axis=1, keepdims=True)
        xl = x0 * s + b + xl
    return xl.astype(x.dtype)


if __name__ == "__main__":
    root = jax.random.PRNGKey(0)

    def run_case(key, B, D, L, dtype, tol, kernel_scale=1.0):
        kx, kk, kb = jax.random.split(key, 3)
        x = jax.random.normal(kx, (B, D), dtype=jnp.float32).astype(dtype)
        std = (2.0 / (D + 1)) ** 0.5              # xavier_normal_ for (D, 1)
        kernels = kernel_scale * std * jax.random.normal(kk, (L, D), jnp.float32)
        biases = 0.01 * jax.random.normal(kb, (L, D), jnp.float32)

        out = jax.block_until_ready(crossnet_forward(x, kernels, biases))
        ref = crossnet_reference(x, kernels, biases)

        assert out.shape == (B, D) and out.dtype == x.dtype, (out.shape, out.dtype)
        ok = jnp.allclose(out.astype(jnp.float32), ref.astype(jnp.float32),
                          atol=tol, rtol=tol)
        assert ok, f"mismatch: B={B} D={D} L={L} dtype={dtype}"

    keys = jax.random.split(root, 4)
    # Default module config (layer_num=2): VPU/XLU row-dot path, single block.
    run_case(keys[0], 8, 128, 2, jnp.float32, 1e-4)
    # layer_num >= 3: MXU row-dot path, 2 grid steps (megacore split).
    run_case(keys[1], 32, 256, 4, jnp.float32, 3e-2)
    # layer_num > max_unroll: fori_loop path with pl.ds weight/bias slices.
    run_case(keys[2], 16, 128, 10, jnp.float32, 1e-3, kernel_scale=0.5)
    # bf16 I/O (halves HBM traffic); compute stays f32 inside the kernel.
    run_case(keys[3], 32, 128, 2, jnp.bfloat16, 5e-2)

    print("KERNEL_OK")
</pallas_src>

<mosaic_0001>
module attributes {stable_mosaic.version = 11 : i64} {
  func.func @_crossnet_kernel(%arg0: i32, %arg1: memref<8x128xf32, #tpu.memory_space<vmem>>, %arg2: memref<4x128xf32, #tpu.memory_space<vmem>>, %arg3: memref<8x128xf32, #tpu.memory_space<vmem>>, %arg4: memref<8x128xf32, #tpu.memory_space<vmem>>) attributes {dimension_semantics = [#tpu.dimension_semantics<parallel>], iteration_bounds = array<i64: 1>, scalar_prefetch = 0 : i64, scratch_operands = 0 : i64, tpu.core_type = #tpu.core_type<tc>, window_params = [{transform_indices = @transform_0, window_bounds = array<i64: 8, 128>}, {pipeline_mode = #tpu.pipeline_mode<synchronous>, transform_indices = @transform_1, window_bounds = array<i64: 4, 128>}, {pipeline_mode = #tpu.pipeline_mode<synchronous>, transform_indices = @transform_2, window_bounds = array<i64: 8, 128>}, {transform_indices = @transform_3, window_bounds = array<i64: 8, 128>}]} {
    %c0 = arith.constant 0 : index
    %c0_0 = arith.constant 0 : index
    %0 = vector.load %arg1[%c0, %c0_0] : memref<8x128xf32, #tpu.memory_space<vmem>>, vector<8x128xf32>
    %c2 = arith.constant 2 : index
    %c0_1 = arith.constant 0 : index
    %1 = vector.load %arg2[%c2, %c0_1] : memref<4x128xf32, #tpu.memory_space<vmem>>, vector<1x128xf32>
    %c0_2 = arith.constant 0 : index
    %c0_3 = arith.constant 0 : index
    %2 = vector.load %arg2[%c0_2, %c0_3] : memref<4x128xf32, #tpu.memory_space<vmem>>, vector<1x128xf32>
    %3 = vector.broadcast %2 : vector<1x128xf32> to vector<8x128xf32>
    %4 = arith.mulf %0, %3 : vector<8x128xf32>
    %cst = arith.constant dense<0.000000e+00> : vector<8xf32>
    %5 = vector.multi_reduction <add>, %4, %cst [1] : vector<8x128xf32> to vector<8xf32>
    %6 = vector.shape_cast %5 : vector<8xf32> to vector<8x1xf32>
    %7 = vector.broadcast %6 : vector<8x1xf32> to vector<8x128xf32>
    %8 = arith.mulf %0, %7 : vector<8x128xf32>
    %9 = vector.broadcast %1 : vector<1x128xf32> to vector<8x128xf32>
    %10 = arith.addf %8, %9 : vector<8x128xf32>
    %11 = arith.addf %10, %0 : vector<8x128xf32>
    %c3 = arith.constant 3 : index
    %c0_4 = arith.constant 0 : index
    %12 = vector.load %arg2[%c3, %c0_4] : memref<4x128xf32, #tpu.memory_space<vmem>>, vector<1x128xf32>
    %c1 = arith.constant 1 : index
    %c0_5 = arith.constant 0 : index
    %13 = vector.load %arg2[%c1, %c0_5] : memref<4x128xf32, #tpu.memory_space<vmem>>, vector<1x128xf32>
    %14 = vector.broadcast %13 : vector<1x128xf32> to vector<8x128xf32>
    %15 = arith.mulf %11, %14 : vector<8x128xf32>
    %cst_6 = arith.constant dense<0.000000e+00> : vector<8xf32>
    %16 = vector.multi_reduction <add>, %15, %cst_6 [1] : vector<8x128xf32> to vector<8xf32>
    %17 = vector.shape_cast %16 : vector<8xf32> to vector<8x1xf32>
    %18 = vector.broadcast %17 : vector<8x1xf32> to vector<8x128xf32>
    %19 = arith.mulf %0, %18 : vector<8x128xf32>
    %20 = vector.broadcast %12 : vector<1x128xf32> to vector<8x128xf32>
    %21 = arith.addf %19, %20 : vector<8x128xf32>
    %22 = arith.addf %21, %11 : vector<8x128xf32>
    %c0_7 = arith.constant 0 : index
    %c0_8 = arith.constant 0 : index
    %23 = vector.load %arg4[%c0_7, %c0_8] : memref<8x128xf32, #tpu.memory_space<vmem>>, vector<8x128xf32>
    tpu.vector_store %arg4[%c0_7, %c0_8], %22 {strides = array<i32>} : memref<8x128xf32, #tpu.memory_space<vmem>>, vector<8x128xf32>,
    return
  }
  func.func @transform_0(%arg0: i32) -> (i32, i32) {
    %c0_i32 = arith.constant 0 : i32
    %c0_i32_0 = arith.constant 0 : i32
    return %arg0, %c0_i32 : i32, i32
  }
  func.func @transform_1(%arg0: i32) -> (i32, i32) {
    %c0_i32 = arith.constant 0 : i32
    %c0_i32_0 = arith.constant 0 : i32
    %c0_i32_1 = arith.constant 0 : i32
    return %c0_i32, %c0_i32_0 : i32, i32
  }
  func.func @transform_2(%arg0: i32) -> (i32, i32) {
    %c0_i32 = arith.constant 0 : i32
    %c0_i32_0 = arith.constant 0 : i32
    %c0_i32_1 = arith.constant 0 : i32
    return %c0_i32, %c0_i32_0 : i32, i32
  }
  func.func @transform_3(%arg0: i32) -> (i32, i32) {
    %c0_i32 = arith.constant 0 : i32
    %c0_i32_0 = arith.constant 0 : i32
    return %arg0, %c0_i32 : i32, i32
  }
}

</mosaic_0001>

<llo_original>
// kernel: tpu_custom_call.1
$region0: #{tpu_custom_call.1}
  #allocation0 [shape = 'u32[]', space=smem, size = 0x4, offset = 0x4, fixed_abs, tag = 'smem constant byte address 0x4 - core index']
  #allocation1 [shape = 'u32[144,128]{1,0:T(1,128)}', space=vmem, size = 0x12000, scoped, tag = 'internal scratch']
  %s0 = inlined_call_operand.hbm [shape: f32[8,128], index: 0, kind: input, shape index: {}]
  %s1 = inlined_call_operand.hbm [shape: f32[4,128], index: 1, kind: input, shape index: {}]
  %s2 = inlined_call_operand.hbm [shape: f32[8,128], index: 2, kind: input, shape index: {}]
  %s3 = inlined_call_operand.hbm [shape: f32[8,128], index: 3, kind: output, shape index: {}]
  %s4 = sld [smem:[#allocation0]]
  $region34: #{tpu_custom_call.1} parent=0
    _
  %s6 = ssub.s32 1, %s4
  %s7 = scalar_select 0, %s6, %s4
  $region1: #{tpu_custom_call.1} parent=0
    #allocation2 [shape = 'u8[4096]{0}', space=vmem, size = 0x1000, scoped, tag = 'input window, operand 0, single buffered']
    #allocation3 [shape = 's32[1]{0}', space=sflag, size = 0x4, scoped, tag = 'scoped memory for tpu_custom_call.1']
    #allocation4 [shape = 's32[1]{0}', space=sflag, size = 0x4, scoped, tag = 'scoped memory for tpu_custom_call.1']
    #allocation5 [shape = 'u8[2048]{0}', space=vmem, size = 0x800, scoped, tag = 'input window, operand 1, single buffered']
    #allocation6 [shape = 's32[1]{0}', space=sflag, size = 0x4, scoped, tag = 'scoped memory for tpu_custom_call.1']
    #allocation7 [shape = 'u8[4096]{0}', space=vmem, size = 0x1000, scoped, tag = 'input window, operand 2, single buffered']
    #allocation8 [shape = 'u8[4096]{0}', space=vmem, size = 0x1000, scoped, tag = 'output window, operand 0, single buffered']
    %8 = vsyncpa [#allocation3], 0
    %9 = vsyncpa [#allocation6], 0
    %10 = vsyncpa [#allocation4], 0
    // Predicated region
    $region2: #{tpu_custom_call.1} parent=1 // pred_check
      _
    $region3: #{tpu_custom_call.1} parent=1 // pred_check_branch
      %12 = sbr.rel (0) target = $region5
    $region4: #{tpu_custom_call.1} parent=1 // pred_region
      %s14 = ssub.s32 128, 128
      %15 = vsyncadd [#allocation3], %s14
      %s17 = sshll.u32 [#allocation2], 4
      %s18 = int_to_ptr.vmem [resolvable:$true] %s17
      %20 = dma.hbm_to_vmem [thread:$0]  %s0, 128, %s18, [#allocation3]
    $region5: #{tpu_custom_call.1} parent=1 // pred_fallthru
      _
    // Predicated region
    $region6: #{tpu_custom_call.1} parent=1 // pred_check
      _
    $region7: #{tpu_custom_call.1} parent=1 // pred_check_branch
      %22 = sbr.rel (0) target = $region9
    $region8: #{tpu_custom_call.1} parent=1 // pred_region
      %s24 = ssub.s32 64, 64
      %25 = vsyncadd [#allocation6], %s24
      %s27 = sshll.u32 [#allocation5], 4
      %s28 = int_to_ptr.vmem [resolvable:$true] %s27
      %30 = dma.hbm_to_vmem [thread:$0]  %s1, 64, %s28, [#allocation6]
    $region9: #{tpu_custom_call.1} parent=1 // pred_fallthru
      _
    // Predicated region
    $region10: #{tpu_custom_call.1} parent=1 // pred_check
      _
    $region11: #{tpu_custom_call.1} parent=1 // pred_check_branch
      %32 = sbr.rel (0) target = $region13
    $region12: #{tpu_custom_call.1} parent=1 // pred_region
      %s34 = ssub.s32 128, 128
      %35 = vsyncadd [#allocation6], %s34
      %s37 = sshll.u32 [#allocation7], 4
      %s38 = int_to_ptr.vmem [resolvable:$true] %s37
      %40 = dma.hbm_to_vmem [thread:$0]  %s2, 128, %s38, [#allocation6]
    $region13: #{tpu_custom_call.1} parent=1 // pred_fallthru
      _
    // Predicated region
    $region14: #{tpu_custom_call.1} parent=1 // pred_check
      _
    $region15: #{tpu_custom_call.1} parent=1 // pred_check_branch
      %42 = sbr.rel (0) target = $region17
    $region16: #{tpu_custom_call.1} parent=1 // pred_region
      %43 = dma.done [#allocation3], 128
    $region17: #{tpu_custom_call.1} parent=1 // pred_fallthru
      _
    // Predicated region
    $region18: #{tpu_custom_call.1} parent=1 // pred_check
      _
    $region19: #{tpu_custom_call.1} parent=1 // pred_check_branch
      %45 = sbr.rel (0) target = $region21
    $region20: #{tpu_custom_call.1} parent=1 // pred_region
      %46 = dma.done [#allocation6], 64
    $region21: #{tpu_custom_call.1} parent=1 // pred_fallthru
      _
    // Predicated region
    $region22: #{tpu_custom_call.1} parent=1 // pred_check
      _
    $region23: #{tpu_custom_call.1} parent=1 // pred_check_branch
      %48 = sbr.rel (0) target = $region25
    $region24: #{tpu_custom_call.1} parent=1 // pred_region
      %49 = dma.done [#allocation6], 128
    $region25: #{tpu_custom_call.1} parent=1 // pred_fallthru
      _
    %v50 = vld [vmem:[#allocation2] sm:$0xff]
    %v51 = vld [vmem:[#allocation5 + $0x2] sm:$0x1]
    %v52 = vld [vmem:[#allocation5] sm:$0x1]
    %v53 = vlaneseq
    %v54 = vshrl.u32 %v53, 7
    %v55 = vsub.s32 0, %v54
    %v56 = vrot.slane %v52, %v55
    %v57 = vmul.f32 %v50, %v56
    %58 = vadd.xlane.f32.xlu0 %v57
    %v59 = vpop.xlane.xlu0 %58
    %v60 = vmul.f32 %v50, %v59
    %v61 = vlaneseq
    %v62 = vshrl.u32 %v61, 7
    %v63 = vsub.s32 0, %v62
    %v64 = vrot.slane %v51, %v63
    %v65 = vadd.f32 %v60, %v64
    %v66 = vadd.f32 %v65, %v50
    %v67 = vld [vmem:[#allocation5 + $0x3] sm:$0x1]
    %v68 = vld [vmem:[#allocation5 + $0x1] sm:$0x1]
    %v69 = vlaneseq
    %v70 = vshrl.u32 %v69, 7
    %v71 = vsub.s32 0, %v70
    %v72 = vrot.slane %v68, %v71
    %v73 = vmul.f32 %v66, %v72
    %74 = vadd.xlane.f32.xlu0 %v73
    %v75 = vpop.xlane.xlu0 %74
    %v76 = vmul.f32 %v50, %v75
    %v77 = vlaneseq
    %v78 = vshrl.u32 %v77, 7
    %v79 = vsub.s32 0, %v78
    %v80 = vrot.slane %v67, %v79
    %v81 = vadd.f32 %v76, %v80
    %v82 = vadd.f32 %v81, %v66
    %83 = vst [vmem:[#allocation8] sm:$0xff] %v82
    // Predicated region
    $region26: #{tpu_custom_call.1} parent=1 // pred_check
      _
    $region27: #{tpu_custom_call.1} parent=1 // pred_check_branch
      %85 = sbr.rel (0) target = $region29
    $region28: #{tpu_custom_call.1} parent=1 // pred_region
      %s87 = ssub.s32 128, 128
      %88 = vsyncadd [#allocation4], %s87
      %s90 = sshll.u32 [#allocation8], 4
      %s91 = int_to_ptr.vmem [resolvable:$true] %s90
      %93 = dma.vmem_to_hbm [thread:$0]  %s91, 128, %s3, [#allocation4]
    $region29: #{tpu_custom_call.1} parent=1 // pred_fallthru
      _
    // Predicated region
    $region30: #{tpu_custom_call.1} parent=1 // pred_check
      _
    $region31: #{tpu_custom_call.1} parent=1 // pred_check_branch
      %95 = sbr.rel (0) target = $region33
    $region32: #{tpu_custom_call.1} parent=1 // pred_region
      %96 = dma.done [#allocation4], 128
    $region33: #{tpu_custom_call.1} parent=1 // pred_fallthru
      _
    %97 = vsyncpa [#allocation3], 1
    %98 = vsyncpa [#allocation6], 1
    %99 = vsyncpa [#allocation4], 1

</llo_original>
